<compile_context>
chip_gen: v7x
topology: tpu7x:2x2x1
jax: 0.10.0
libtpu: 0.0.40
codegen_flags: <defaults>
</compile_context>

<pallas_src>
import functools

import jax
import jax.numpy as jnp
from jax.experimental import pallas as pl
from jax.experimental.pallas import tpu as pltpu


# ----------------------------------------------------------------------------
# One-time hardware / capability probes (cached at module level).
# ----------------------------------------------------------------------------

_VMEM_BUDGET = None


def _vmem_budget_bytes():
    """~80% of this chip's per-core VMEM capacity (headroom for compiler
    scratch + DMA slots).  v5e/v6e (128 MiB) -> ~102 MiB, v7x (64 MiB) -> ~51 MiB."""
    global _VMEM_BUDGET
    if _VMEM_BUDGET is None:
        try:
            cap = int(getattr(pltpu.get_tpu_info(), "vmem_capacity_bytes",
                              128 << 20))
        except Exception:
            cap = 64 << 20          # unknown part: assume the smallest (v7x)
        _VMEM_BUDGET = max(32 << 20, cap * 4 // 5)
    return _VMEM_BUDGET


_BUFFERED1_OK = None


def _probe_copy_kernel(x_ref, o_ref):
    o_ref[...] = x_ref[...] + 1.0


def _buffered_single_supported():
    """Probe once whether pipeline_mode=pl.Buffered(1) compiles+runs on this
    jax/TPU combo.  Falls back cleanly (plain double-buffered specs) if not."""
    global _BUFFERED1_OK
    if _BUFFERED1_OK is None:
        try:
            spec = pl.BlockSpec((8, 128), lambda i: (0, 0),
                                pipeline_mode=pl.Buffered(1))
            fn = pl.pallas_call(
                _probe_copy_kernel,
                out_shape=jax.ShapeDtypeStruct((8, 128), jnp.float32),
                grid=(1,),
                in_specs=[spec],
                out_specs=pl.BlockSpec((8, 128), lambda i: (0, 0)),
            )
            jax.block_until_ready(fn(jnp.zeros((8, 128), jnp.float32)))
            _BUFFERED1_OK = True
        except Exception:
            _BUFFERED1_OK = False
    return _BUFFERED1_OK


def _multi_tensorcore_chip():
    """True for parts whose 'parallel' grid axes span >1 TensorCore (v7x dual
    TC, v4/v5p megacore).  Best-effort detection; a wrong answer only affects
    performance, never correctness."""
    try:
        kind = jax.devices()[0].device_kind.lower()
    except Exception:
        return False
    return ("v7" in kind) or ("v4" in kind) or ("v5p" in kind)


# ----------------------------------------------------------------------------
# Kernel
# ----------------------------------------------------------------------------

def _ffn_ln_kernel(x_ref, w1_ref, b1_ref, w2_ref, b2_ref, g_ref, beta_ref,
                   o_ref, *scratch, nk):
    # x_ref: (tm, E)   w1_ref: (E, th)  b1_ref: (1, th)
    # w2_ref: (th, E)  b2_ref / g_ref / beta_ref: (1, E)
    # scratch[0] (only when nk > 1): (tm, E) f32 accumulator, resident over k.

    # ffn[0]: Linear(emb -> hidden tile) + ReLU.  MXU runs in the input dtype
    # (bf16 stays bf16); accumulation + bias/ReLU in f32 (v5e has no bf16 VPU).
    h = jnp.dot(x_ref[...], w1_ref[...], preferred_element_type=jnp.float32)
    h = jnp.maximum(h + b1_ref[...].astype(jnp.float32), 0.0)

    # ffn[2]: Linear(hidden tile -> emb), f32 partial product for this k step.
    y = jnp.dot(h.astype(w2_ref.dtype), w2_ref[...],
                preferred_element_type=jnp.float32)

    def _finalize(y_f32):
        # residual + LayerNorm (eps=1e-5, elementwise affine), all in f32.
        # x is re-read here (cheap vld from resident VMEM) instead of being
        # kept live across both matmuls.
        z = (y_f32 + b2_ref[...].astype(jnp.float32)
             + x_ref[...].astype(jnp.float32))
        inv_e = 1.0 / z.shape[-1]
        # fused one-pass statistics: var = E[z^2] - mean^2
        mean = jnp.sum(z, axis=-1, keepdims=True) * inv_e
        var = jnp.sum(z * z, axis=-1, keepdims=True) * inv_e - mean * mean
        z_hat = (z - mean) * jax.lax.rsqrt(var + 1e-5)
        o_ref[...] = (z_hat * g_ref[...].astype(jnp.float32)
                      + beta_ref[...].astype(jnp.float32)).astype(o_ref.dtype)

    if nk == 1:
        # Weights fully resident: no accumulator scratch / traffic at all.
        _finalize(y)
    else:
        acc_ref = scratch[0]
        k = pl.program_id(1)

        @pl.when(k == 0)
        def _init():
            acc_ref[...] = y            # direct write: no zero-init round trip

        @pl.when(k > 0)
        def _accum():
            acc_ref[...] += y

        @pl.when(k == nk - 1)
        def _done():
            _finalize(acc_ref[...])


# ----------------------------------------------------------------------------
# Wrapper
# ----------------------------------------------------------------------------

def _round_up(a, b):
    return (a + b - 1) // b * b


@functools.partial(jax.jit, static_argnames=("tm", "max_th"))
def ffn_forward(x, w1, b1, w2, b2, gamma, beta, *, tm=None, max_th=512):
    """x: [batch, seq, emb].  Computes LayerNorm(relu(x@w1+b1)@w2 + b2 + x)."""
    B, S, E = x.shape
    E_w, H = w1.shape
    assert E_w == E
    M = B * S
    x2 = x.reshape(M, E)

    budget = _vmem_budget_bytes()
    buf1_ok = _buffered_single_supported()

    # ---- hidden-dim (k) tiling: bounds resident weight VMEM ---------------
    # Keep th a multiple of 256 when tiling (2x256x256 MXUs on v6e/v7x);
    # th=128 is only for tests.
    if H <= max_th:
        th, Hp = H, H
    else:
        assert max_th % 128 == 0, "hidden tile must be a multiple of 128"
        th = max_th
        Hp = _round_up(H, th)
        w1 = jnp.pad(w1, ((0, 0), (0, Hp - H)))
        b1 = jnp.pad(b1, ((0, 0), (0, Hp - H)))
        w2 = jnp.pad(w2, ((0, Hp - H), (0, 0)))
    nk = Hp // th

    # ---- row (i) tiling ----------------------------------------------------
    itm = x.dtype.itemsize
    wit = w1.dtype.itemsize

    def _vmem_estimate(tm_):
        cb = 1 if buf1_ok else 2             # buffering of constant-index blocks
        wb = cb if nk == 1 else 2            # w1/b1/w2 constant only if nk == 1
        return (2 * tm_ * E * itm            # x tile (double buffered)
                + 2 * tm_ * E * itm          # out tile (double buffered)
                + wb * (E * th + th * E + th) * wit   # w1, w2, b1 tiles
                + cb * 3 * E * wit           # b2, gamma, beta
                + (tm_ * E * 4 if nk > 1 else 0)      # f32 accumulator scratch
                + tm_ * th * 4               # live (tm, th) f32 intermediate
                + tm_ * E * 4)               # live (tm, E) f32 partial product

    if tm is None:
        # Bigger row tiles cut weight re-streaming (w1/w2 are re-DMA'd once per
        # row tile): 512 on 128-MiB parts (v5e/v6e), 256 on v7x-class parts.
        tm = 512 if budget >= (80 << 20) else 256
    tm = max(8, _round_up(tm, 8))
    while tm > 128 and _vmem_estimate(tm) * 3 // 2 > budget:
        tm //= 2

    m8 = _round_up(M, 8)
    tm = min(tm, m8)
    # On multi-TensorCore parts keep >= 2 steps on the 'parallel' row axis so
    # both cores get work; single-TC v5e/v6e keep the single big tile.
    if _multi_tensorcore_chip() and m8 > 8 and _round_up(m8, tm) // tm < 2:
        tm = max(8, _round_up((m8 + 1) // 2, 8))
    Mp = _round_up(M, tm)
    if Mp != M:
        x2 = jnp.pad(x2, ((0, Mp - M), (0, 0)))

    grid = (Mp // tm, nk)

    # ---- scoped VMEM limit: estimate + headroom, per-generation cap -------
    est = _vmem_estimate(tm)
    vmem_limit = int(min(max(est * 3 // 2 + (1 << 20), 32 << 20), budget))

    def _spec(shape, index_map, constant_index):
        if constant_index and buf1_ok:
            # Constant-index blocks are DMA'd once; single-buffering them
            # reclaims the second buffer's VMEM (matters most on v7x).
            return pl.BlockSpec(shape, index_map, pipeline_mode=pl.Buffered(1))
        return pl.BlockSpec(shape, index_map)

    weights_const = (nk == 1)
    in_specs = [
        pl.BlockSpec((tm, E), lambda i, k: (i, 0)),             # x rows
        _spec((E, th), lambda i, k: (0, k), weights_const),     # w1 hidden tile
        _spec((1, th), lambda i, k: (0, k), weights_const),     # b1 hidden tile
        _spec((th, E), lambda i, k: (k, 0), weights_const),     # w2 hidden tile
        _spec((1, E), lambda i, k: (0, 0), True),               # b2 (constant)
        _spec((1, E), lambda i, k: (0, 0), True),               # ln gamma
        _spec((1, E), lambda i, k: (0, 0), True),               # ln beta
    ]
    scratch_shapes = [] if nk == 1 else [pltpu.VMEM((tm, E), jnp.float32)]

    out = pl.pallas_call(
        functools.partial(_ffn_ln_kernel, nk=nk),
        out_shape=jax.ShapeDtypeStruct((Mp, E), x.dtype),
        grid_spec=pltpu.PrefetchScalarGridSpec(
            num_scalar_prefetch=0,
            grid=grid,
            in_specs=in_specs,
            out_specs=pl.BlockSpec((tm, E), lambda i, k: (i, 0)),
            scratch_shapes=scratch_shapes,
        ),
        compiler_params=pltpu.CompilerParams(
            dimension_semantics=("parallel", "arbitrary"),
            vmem_limit_bytes=vmem_limit,
        ),
    )(x2, w1, b1, w2, b2, gamma, beta)
    return out[:M].reshape(B, S, E)


# ----------------------------------------------------------------------------
# Parameter init mirroring the PyTorch module + pure-JAX reference
# ----------------------------------------------------------------------------

def init_params(key, emb_size, hidden_size):
    """Linear weights ~ xavier_uniform with gain=sqrt(2) (relu gain),
       Linear biases  ~ PyTorch default uniform(-1/sqrt(fan_in), 1/sqrt(fan_in)),
       LayerNorm gamma=1, beta=0."""
    k1, k2, k3, k4 = jax.random.split(key, 4)
    gain = jnp.sqrt(2.0)

    def xavier(k, fan_in, fan_out):
        bound = gain * jnp.sqrt(6.0 / (fan_in + fan_out))
        # stored transposed relative to torch (we compute x @ W)
        return jax.random.uniform(k, (fan_in, fan_out), jnp.float32, -bound, bound)

    w1 = xavier(k1, emb_size, hidden_size)
    b1 = jax.random.uniform(k2, (1, hidden_size), jnp.float32,
                            -1.0 / jnp.sqrt(emb_size), 1.0 / jnp.sqrt(emb_size))
    w2 = xavier(k3, hidden_size, emb_size)
    b2 = jax.random.uniform(k4, (1, emb_size), jnp.float32,
                            -1.0 / jnp.sqrt(hidden_size), 1.0 / jnp.sqrt(hidden_size))
    gamma = jnp.ones((1, emb_size), jnp.float32)
    beta = jnp.zeros((1, emb_size), jnp.float32)
    return w1, b1, w2, b2, gamma, beta


def ffn_reference(x, w1, b1, w2, b2, gamma, beta):
    h = jnp.maximum(x @ w1 + b1[0], 0.0)
    y = h @ w2 + b2[0]
    z = y + x
    mean = jnp.mean(z, axis=-1, keepdims=True)
    var = jnp.mean((z - mean) ** 2, axis=-1, keepdims=True)
    return (z - mean) / jnp.sqrt(var + 1e-5) * gamma[0] + beta[0]


if __name__ == "__main__":
    # E multiple of 128 -> lane-dense output stores; seq=13 exercises row padding.
    batch, seq, emb, hidden = 2, 13, 128, 256

    key = jax.random.PRNGKey(0)
    kx, kp = jax.random.split(key)
    x = jax.random.normal(kx, (batch, seq, emb), jnp.float32)
    params = init_params(kp, emb, hidden)

    ref = ffn_reference(x, *params)

    # f32 path (weights fully resident, nk == 1 fast path).
    out = jax.block_until_ready(ffn_forward(x, *params))
    assert out.shape == (batch, seq, emb)
    assert jnp.allclose(out, ref, atol=1e-4, rtol=1e-4), "f32 mismatch vs reference"

    # Hidden-dim-tiled path (test-only th=128: exercises the accumulator /
    # 'arbitrary' H axis; production keeps th at 256/512 multiples).
    out_ht = jax.block_until_ready(ffn_forward(x, *params, max_th=128))
    assert jnp.allclose(out_ht, ref, atol=1e-4, rtol=1e-4), "H-tiled mismatch"

    # bf16 path (performance path): bf16 MXU inputs, f32 accumulation + f32 LN.
    xb = x.astype(jnp.bfloat16)
    params_b = tuple(p.astype(jnp.bfloat16) for p in params)
    out_b = jax.block_until_ready(ffn_forward(xb, *params_b))
    ref_b = ffn_reference(xb.astype(jnp.float32),
                          *(p.astype(jnp.float32) for p in params_b))
    assert out_b.dtype == jnp.bfloat16
    assert jnp.allclose(out_b.astype(jnp.float32), ref_b, atol=5e-2, rtol=5e-2), \
        "bf16 mismatch vs reference"

    print("KERNEL_OK")
</pallas_src>

<mosaic_0001>
module attributes {stable_mosaic.version = 11 : i64} {
  func.func @_ffn_ln_kernel(%arg0: i32, %arg1: i32, %arg2: memref<32x128xf32, #tpu.memory_space<vmem>>, %arg3: memref<128x256xf32, #tpu.memory_space<vmem>>, %arg4: memref<1x256xf32, #tpu.memory_space<vmem>>, %arg5: memref<256x128xf32, #tpu.memory_space<vmem>>, %arg6: memref<1x128xf32, #tpu.memory_space<vmem>>, %arg7: memref<1x128xf32, #tpu.memory_space<vmem>>, %arg8: memref<1x128xf32, #tpu.memory_space<vmem>>, %arg9: memref<32x128xf32, #tpu.memory_space<vmem>>) attributes {dimension_semantics = [#tpu.dimension_semantics<parallel>, #tpu.dimension_semantics<arbitrary>], iteration_bounds = array<i64: 1, 1>, scalar_prefetch = 0 : i64, scratch_operands = 0 : i64, tpu.core_type = #tpu.core_type<tc>, window_params = [{transform_indices = @transform_0, window_bounds = array<i64: 32, 128>}, {pipeline_mode = #tpu.pipeline_mode<synchronous>, transform_indices = @transform_1, window_bounds = array<i64: 128, 256>}, {pipeline_mode = #tpu.pipeline_mode<synchronous>, transform_indices = @transform_2, window_bounds = array<i64: 1, 256>}, {pipeline_mode = #tpu.pipeline_mode<synchronous>, transform_indices = @transform_3, window_bounds = array<i64: 256, 128>}, {pipeline_mode = #tpu.pipeline_mode<synchronous>, transform_indices = @transform_4, window_bounds = array<i64: 1, 128>}, {pipeline_mode = #tpu.pipeline_mode<synchronous>, transform_indices = @transform_5, window_bounds = array<i64: 1, 128>}, {pipeline_mode = #tpu.pipeline_mode<synchronous>, transform_indices = @transform_6, window_bounds = array<i64: 1, 128>}, {transform_indices = @transform_7, window_bounds = array<i64: 32, 128>}]} {
    %c0 = arith.constant 0 : index
    %c0_0 = arith.constant 0 : index
    %0 = vector.load %arg2[%c0, %c0_0] : memref<32x128xf32, #tpu.memory_space<vmem>>, vector<32x128xf32>
    %c0_1 = arith.constant 0 : index
    %c0_2 = arith.constant 0 : index
    %1 = vector.load %arg3[%c0_1, %c0_2] : memref<128x256xf32, #tpu.memory_space<vmem>>, vector<128x256xf32>
    %cst = arith.constant dense<0.000000e+00> : vector<32x256xf32>
    %2 = tpu.matmul %0, %1, %cst {dimension_numbers = #tpu.dot_dimension_numbers<[1], [0], [0], [1], [0, 0, 1, 1], [], []>} : vector<32x128xf32>, vector<128x256xf32>, vector<32x256xf32> -> vector<32x256xf32>
    %c0_3 = arith.constant 0 : index
    %c0_4 = arith.constant 0 : index
    %3 = vector.load %arg4[%c0_3, %c0_4] : memref<1x256xf32, #tpu.memory_space<vmem>>, vector<1x256xf32>
    %4 = vector.broadcast %3 : vector<1x256xf32> to vector<32x256xf32>
    %5 = arith.addf %2, %4 : vector<32x256xf32>
    %cst_5 = arith.constant 0.000000e+00 : f32
    %6 = vector.broadcast %cst_5 : f32 to vector<32x256xf32>
    %7 = arith.maximumf %5, %6 : vector<32x256xf32>
    %c0_6 = arith.constant 0 : index
    %c0_7 = arith.constant 0 : index
    %8 = vector.load %arg5[%c0_6, %c0_7] : memref<256x128xf32, #tpu.memory_space<vmem>>, vector<256x128xf32>
    %cst_8 = arith.constant dense<0.000000e+00> : vector<32x128xf32>
    %9 = tpu.matmul %7, %8, %cst_8 {dimension_numbers = #tpu.dot_dimension_numbers<[1], [0], [0], [1], [0, 0, 1, 1], [], []>} : vector<32x256xf32>, vector<256x128xf32>, vector<32x128xf32> -> vector<32x128xf32>
    %c0_9 = arith.constant 0 : index
    %c0_10 = arith.constant 0 : index
    %10 = vector.load %arg6[%c0_9, %c0_10] : memref<1x128xf32, #tpu.memory_space<vmem>>, vector<1x128xf32>
    %11 = vector.broadcast %10 : vector<1x128xf32> to vector<32x128xf32>
    %12 = arith.addf %9, %11 : vector<32x128xf32>
    %c0_11 = arith.constant 0 : index
    %c0_12 = arith.constant 0 : index
    %13 = vector.load %arg2[%c0_11, %c0_12] : memref<32x128xf32, #tpu.memory_space<vmem>>, vector<32x128xf32>
    %14 = arith.addf %12, %13 : vector<32x128xf32>
    %cst_13 = arith.constant dense<0.000000e+00> : vector<32xf32>
    %15 = vector.multi_reduction <add>, %14, %cst_13 [1] : vector<32x128xf32> to vector<32xf32>
    %16 = vector.shape_cast %15 : vector<32xf32> to vector<32x1xf32>
    %cst_14 = arith.constant 7.812500e-03 : f32
    %17 = vector.broadcast %cst_14 : f32 to vector<32x1xf32>
    %18 = arith.mulf %16, %17 : vector<32x1xf32>
    %19 = arith.mulf %14, %14 : vector<32x128xf32>
    %cst_15 = arith.constant dense<0.000000e+00> : vector<32xf32>
    %20 = vector.multi_reduction <add>, %19, %cst_15 [1] : vector<32x128xf32> to vector<32xf32>
    %21 = vector.shape_cast %20 : vector<32xf32> to vector<32x1xf32>
    %cst_16 = arith.constant 7.812500e-03 : f32
    %22 = vector.broadcast %cst_16 : f32 to vector<32x1xf32>
    %23 = arith.mulf %21, %22 : vector<32x1xf32>
    %24 = arith.mulf %18, %18 : vector<32x1xf32>
    %25 = arith.subf %23, %24 : vector<32x1xf32>
    %26 = vector.broadcast %18 : vector<32x1xf32> to vector<32x128xf32>
    %27 = arith.subf %14, %26 : vector<32x128xf32>
    %cst_17 = arith.constant 9.99999974E-6 : f32
    %28 = vector.broadcast %cst_17 : f32 to vector<32x1xf32>
    %29 = arith.addf %25, %28 : vector<32x1xf32>
    %30 = math.rsqrt %29 : vector<32x1xf32>
    %31 = vector.broadcast %30 : vector<32x1xf32> to vector<32x128xf32>
    %32 = arith.mulf %27, %31 : vector<32x128xf32>
    %c0_18 = arith.constant 0 : index
    %c0_19 = arith.constant 0 : index
    %33 = vector.load %arg7[%c0_18, %c0_19] : memref<1x128xf32, #tpu.memory_space<vmem>>, vector<1x128xf32>
    %34 = vector.broadcast %33 : vector<1x128xf32> to vector<32x128xf32>
    %35 = arith.mulf %32, %34 : vector<32x128xf32>
    %c0_20 = arith.constant 0 : index
    %c0_21 = arith.constant 0 : index
    %36 = vector.load %arg8[%c0_20, %c0_21] : memref<1x128xf32, #tpu.memory_space<vmem>>, vector<1x128xf32>
    %37 = vector.broadcast %36 : vector<1x128xf32> to vector<32x128xf32>
    %38 = arith.addf %35, %37 : vector<32x128xf32>
    %c0_22 = arith.constant 0 : index
    %c0_23 = arith.constant 0 : index
    %39 = vector.load %arg9[%c0_22, %c0_23] : memref<32x128xf32, #tpu.memory_space<vmem>>, vector<32x128xf32>
    tpu.vector_store %arg9[%c0_22, %c0_23], %38 {strides = array<i32>} : memref<32x128xf32, #tpu.memory_space<vmem>>, vector<32x128xf32>,
    return
  }
  func.func @transform_0(%arg0: i32, %arg1: i32) -> (i32, i32) {
    %c0_i32 = arith.constant 0 : i32
    %c0_i32_0 = arith.constant 0 : i32
    return %arg0, %c0_i32 : i32, i32
  }
  func.func @transform_1(%arg0: i32, %arg1: i32) -> (i32, i32) {
    %c0_i32 = arith.constant 0 : i32
    %c0_i32_0 = arith.constant 0 : i32
    return %c0_i32, %arg1 : i32, i32
  }
  func.func @transform_2(%arg0: i32, %arg1: i32) -> (i32, i32) {
    %c0_i32 = arith.constant 0 : i32
    %c0_i32_0 = arith.constant 0 : i32
    return %c0_i32, %arg1 : i32, i32
  }
  func.func @transform_3(%arg0: i32, %arg1: i32) -> (i32, i32) {
    %c0_i32 = arith.constant 0 : i32
    %c0_i32_0 = arith.constant 0 : i32
    return %arg1, %c0_i32 : i32, i32
  }
  func.func @transform_4(%arg0: i32, %arg1: i32) -> (i32, i32) {
    %c0_i32 = arith.constant 0 : i32
    %c0_i32_0 = arith.constant 0 : i32
    %c0_i32_1 = arith.constant 0 : i32
    return %c0_i32, %c0_i32_0 : i32, i32
  }
  func.func @transform_5(%arg0: i32, %arg1: i32) -> (i32, i32) {
    %c0_i32 = arith.constant 0 : i32
    %c0_i32_0 = arith.constant 0 : i32
    %c0_i32_1 = arith.constant 0 : i32
    return %c0_i32, %c0_i32_0 : i32, i32
  }
  func.func @transform_6(%arg0: i32, %arg1: i32) -> (i32, i32) {
    %c0_i32 = arith.constant 0 : i32
    %c0_i32_0 = arith.constant 0 : i32
    %c0_i32_1 = arith.constant 0 : i32
    return %c0_i32, %c0_i32_0 : i32, i32
  }
  func.func @transform_7(%arg0: i32, %arg1: i32) -> (i32, i32) {
    %c0_i32 = arith.constant 0 : i32
    %c0_i32_0 = arith.constant 0 : i32
    return %arg0, %c0_i32 : i32, i32
  }
}

</mosaic_0001>

<llo_original>
// kernel: ffn_forward.1
$region0: #{ffn_forward.1}
  #allocation0 [shape = 'u32[]', space=smem, size = 0x4, offset = 0x4, fixed_abs, tag = 'smem constant byte address 0x4 - core index']
  #allocation1 [shape = 'u32[144,128]{1,0:T(1,128)}', space=vmem, size = 0x12000, scoped, tag = 'internal scratch']
  %s0 = inlined_call_operand.vmem [shape: f32[32,128], index: 0, kind: input, shape index: {}]
  %s1 = inlined_call_operand.hbm [shape: f32[128,256], index: 1, kind: input, shape index: {}]
  %s2 = inlined_call_operand.vmem [shape: f32[1,256], index: 2, kind: input, shape index: {}]
  %s3 = inlined_call_operand.hbm [shape: f32[256,128], index: 3, kind: input, shape index: {}]
  %s4 = inlined_call_operand.vmem [shape: f32[1,128], index: 4, kind: input, shape index: {}]
  %s5 = inlined_call_operand.vmem [shape: f32[1,128], index: 5, kind: input, shape index: {}]
  %s6 = inlined_call_operand.vmem [shape: f32[1,128], index: 6, kind: input, shape index: {}]
  %s7 = inlined_call_operand.vmem [shape: f32[32,128], index: 7, kind: output, shape index: {}]
  %s8 = sld [smem:[#allocation0]]
  $region46: #{ffn_forward.1} parent=0
    _
  %s10 = ssub.s32 1, %s8
  %s11 = scalar_select 0, %s10, %s8
  $region1: #{ffn_forward.1} parent=0
    #allocation2 [shape = 'u8[131072]{0}', space=vmem, size = 0x20000, scoped, tag = 'input window, operand 1, single buffered']
    #allocation3 [shape = 's32[1]{0}', space=sflag, size = 0x4, scoped, tag = 'scoped memory for ffn_forward.1']
    #allocation4 [shape = 'u8[131072]{0}', space=vmem, size = 0x20000, scoped, tag = 'input window, operand 3, single buffered']
    #allocation5 [shape = 's32[1]{0}', space=sflag, size = 0x4, scoped, tag = 'scoped memory for ffn_forward.1']
    %12 = vsyncpa [#allocation3], 0
    %13 = vsyncpa [#allocation5], 0
    // Predicated region
    $region2: #{ffn_forward.1} parent=1 // pred_check
      _
    $region3: #{ffn_forward.1} parent=1 // pred_check_branch
      %15 = sbr.rel (0) target = $region5
    $region4: #{ffn_forward.1} parent=1 // pred_region
      _
    $region5: #{ffn_forward.1} parent=1 // pred_fallthru
      _
    // Predicated region
    $region6: #{ffn_forward.1} parent=1 // pred_check
      _
    $region7: #{ffn_forward.1} parent=1 // pred_check_branch
      %17 = sbr.rel (0) target = $region9
    $region8: #{ffn_forward.1} parent=1 // pred_region
      %s19 = ssub.s32 4096, 4096
      %20 = vsyncadd [#allocation3], %s19
      %s21 = sshll.u32 [#allocation2], 4
      %s22 = int_to_ptr.vmem [resolvable:$true] %s21
      %27 = dma.hbm_to_vmem [thread:$0]  %s1, 4096, %s22, [#allocation3], 256, 256, 16
    $region9: #{ffn_forward.1} parent=1 // pred_fallthru
      _
    // Predicated region
    $region10: #{ffn_forward.1} parent=1 // pred_check
      _
    $region11: #{ffn_forward.1} parent=1 // pred_check_branch
      %29 = sbr.rel (0) target = $region13
    $region12: #{ffn_forward.1} parent=1 // pred_region
      _
    $region13: #{ffn_forward.1} parent=1 // pred_fallthru
      _
    // Predicated region
    $region14: #{ffn_forward.1} parent=1 // pred_check
      _
    $region15: #{ffn_forward.1} parent=1 // pred_check_branch
      %31 = sbr.rel (0) target = $region17
    $region16: #{ffn_forward.1} parent=1 // pred_region
      %s33 = ssub.s32 4096, 4096
      %34 = vsyncadd [#allocation5], %s33
      %s35 = sshll.u32 [#allocation4], 4
      %s36 = int_to_ptr.vmem [resolvable:$true] %s35
      %41 = dma.hbm_to_vmem [thread:$0]  %s3, 4096, %s36, [#allocation5], 128, 128, 8
    $region17: #{ffn_forward.1} parent=1 // pred_fallthru
      _
    // Predicated region
    $region18: #{ffn_forward.1} parent=1 // pred_check
      _
    $region19: #{ffn_forward.1} parent=1 // pred_check_branch
      %43 = sbr.rel (0) target = $region21
    $region20: #{ffn_forward.1} parent=1 // pred_region
      _
    $region21: #{ffn_forward.1} parent=1 // pred_fallthru
      _
    // Predicated region
    $region22: #{ffn_forward.1} parent=1 // pred_check
      _
    $region23: #{ffn_forward.1} parent=1 // pred_check_branch
      %45 = sbr.rel (0) target = $region25
    $region24: #{ffn_forward.1} parent=1 // pred_region
      _
    $region25: #{ffn_forward.1} parent=1 // pred_fallthru
      _
    // Predicated region
    $region26: #{ffn_forward.1} parent=1 // pred_check
      _
    $region27: #{ffn_forward.1} parent=1 // pred_check_branch
      %47 = sbr.rel (0) target = $region29
    $region28: #{ffn_forward.1} parent=1 // pred_region
      _
    $region29: #{ffn_forward.1} parent=1 // pred_fallthru
      _
    // Predicated region
    $region30: #{ffn_forward.1} parent=1 // pred_check
      _
    $region31: #{ffn_forward.1} parent=1 // pred_check_branch
      %49 = sbr.rel (0) target = $region33
    $region32: #{ffn_forward.1} parent=1 // pred_region
      %50 = dma.done [#allocation3], 4096
    $region33: #{ffn_forward.1} parent=1 // pred_fallthru
      _
    // Predicated region
    $region34: #{ffn_forward.1} parent=1 // pred_check
      _
    $region35: #{ffn_forward.1} parent=1 // pred_check_branch
      %52 = sbr.rel (0) target = $region37
    $region36: #{ffn_forward.1} parent=1 // pred_region
      %53 = dma.done [#allocation5], 4096
    $region37: #{ffn_forward.1} parent=1 // pred_fallthru
      _
    %v54 = vld [vmem:[%s0] sm:$0xff]
    %v55 = vld [vmem:[%s0 + $0x8] sm:$0xff]
    %v56 = vld [vmem:[%s0 + $0x10] sm:$0xff]
    %v57 = vld [vmem:[%s0 + $0x18] sm:$0xff]
    %v58 = vld [vmem:[#allocation2] sm:$0xff]
    %v59 = vld [vmem:[#allocation2 + $0x8] sm:$0xff]
    %v60 = vld [vmem:[#allocation2 + $0x10] sm:$0xff]
    %v61 = vld [vmem:[#allocation2 + $0x18] sm:$0xff]
    %v62 = vld [vmem:[#allocation2 + $0x20] sm:$0xff]
    %v63 = vld [vmem:[#allocation2 + $0x28] sm:$0xff]
    %v64 = vld [vmem:[#allocation2 + $0x30] sm:$0xff]
    %v65 = vld [vmem:[#allocation2 + $0x38] sm:$0xff]
    %v66 = vld [vmem:[#allocation2 + $0x40] sm:$0xff]
    %v67 = vld [vmem:[#allocation2 + $0x48] sm:$0xff]
    %v68 = vld [vmem:[#allocation2 + $0x50] sm:$0xff]
    %v69 = vld [vmem:[#allocation2 + $0x58] sm:$0xff]
    %v70 = vld [vmem:[#allocation2 + $0x60] sm:$0xff]
    %v71 = vld [vmem:[#allocation2 + $0x68] sm:$0xff]
    %v72 = vld [vmem:[#allocation2 + $0x70] sm:$0xff]
    %v73 = vld [vmem:[#allocation2 + $0x78] sm:$0xff]
    %v74 = vld [vmem:[#allocation2 + $0x80] sm:$0xff]
    %v75 = vld [vmem:[#allocation2 + $0x88] sm:$0xff]
    %v76 = vld [vmem:[#allocation2 + $0x90] sm:$0xff]
    %v77 = vld [vmem:[#allocation2 + $0x98] sm:$0xff]
    %v78 = vld [vmem:[#allocation2 + $0xa0] sm:$0xff]
    %v79 = vld [vmem:[#allocation2 + $0xa8] sm:$0xff]
    %v80 = vld [vmem:[#allocation2 + $0xb0] sm:$0xff]
    %v81 = vld [vmem:[#allocation2 + $0xb8] sm:$0xff]
    %v82 = vld [vmem:[#allocation2 + $0xc0] sm:$0xff]
    %v83 = vld [vmem:[#allocation2 + $0xc8] sm:$0xff]
    %v84 = vld [vmem:[#allocation2 + $0xd0] sm:$0xff]
    %v85 = vld [vmem:[#allocation2 + $0xd8] sm:$0xff]
    %v86 = vld [vmem:[#allocation2 + $0xe0] sm:$0xff]
    %v87 = vld [vmem:[#allocation2 + $0xe8] sm:$0xff]
    %v88 = vld [vmem:[#allocation2 + $0xf0] sm:$0xff]
    %v89 = vld [vmem:[#allocation2 + $0xf8] sm:$0xff]
    %v90 = vld [vmem:[%s2] sm:$0x3]
    %v92 = vlaneseq
    %v93 = vshrl.u32 %v92, 7
    %v94 = vsub.s32 0, %v93
    %v95 = vrot.slane %v90, %v94
    %v96 = vlaneseq
    %v97 = vshrl.u32 %v96, 7
    %v98 = vsub.s32 1, %v97
    %v99 = vrot.slane %v90, %v98
    %102 = vmatprep.subr.mxu0 %v59
    %103 = vmatpush1.msra.mxu0 %v58
    %104 = vmatprep.subr.mxu0 %v61
    %105 = vmatpush1.msra.mxu0 %v60
    %106 = vmatprep.subr.mxu0 %v63
    %107 = vmatpush1.msra.mxu0 %v62
    %108 = vmatprep.subr.mxu0 %v65
    %109 = vmatpush1.msra.mxu0 %v64
    %110 = vmatprep.subr.mxu0 %v67
    %111 = vmatpush1.msra.mxu0 %v66
    %112 = vmatprep.subr.mxu0 %v69
    %113 = vmatpush1.msra.mxu0 %v68
    %114 = vmatprep.subr.mxu0 %v71
    %115 = vmatpush1.msra.mxu0 %v70
    %116 = vmatprep.subr.mxu0 %v73
    %117 = vmatpush1.msra.mxu0 %v72
    %118 = vmatprep.subr.mxu0 %v75
    %119 = vmatpush1.msra.mxu0 %v74
    %120 = vmatprep.subr.mxu0 %v77
    %121 = vmatpush1.msra.mxu0 %v76
    %122 = vmatprep.subr.mxu0 %v79
    %123 = vmatpush1.msra.mxu0 %v78
    %124 = vmatprep.subr.mxu0 %v81
    %125 = vmatpush1.msra.mxu0 %v80
    %126 = vmatprep.subr.mxu0 %v83
    %127 = vmatpush1.msra.mxu0 %v82
    %128 = vmatprep.subr.mxu0 %v85
    %129 = vmatpush1.msra.mxu0 %v84
    %130 = vmatprep.subr.mxu0 %v87
    %131 = vmatpush1.msra.mxu0 %v86
    %132 = vmatprep.subr.mxu0 %v89
    %133 = vmatpush1.msra.mxu0 %v88
    %134 = vmatprep.subr.mxu0 0.0
    %135 = vmatpush1.msra.mxu0 0.0
    %136 = vmatprep.subr.mxu0 0.0
    %137 = vmatpush1.msra.mxu0 0.0
    %138 = vmatprep.subr.mxu0 0.0
    %139 = vmatpush1.msra.mxu0 0.0
    %140 = vmatprep.subr.mxu0 0.0
    %141 = vmatpush1.msra.mxu0 0.0
    %142 = vmatprep.subr.mxu0 0.0
    %143 = vmatpush1.msra.mxu0 0.0
    %144 = vmatprep.subr.mxu0 0.0
    %145 = vmatpush1.msra.mxu0 0.0
    %146 = vmatprep.subr.mxu0 0.0
    %147 = vmatpush1.msra.mxu0 0.0
    %148 = vmatprep.subr.mxu0 0.0
    %149 = vmatpush1.msra.mxu0 0.0
    %150 = vmatprep.subr.mxu0 0.0
    %151 = vmatpush1.msra.mxu0 0.0
    %152 = vmatprep.subr.mxu0 0.0
    %153 = vmatpush1.msra.mxu0 0.0
    %154 = vmatprep.subr.mxu0 0.0
    %155 = vmatpush1.msra.mxu0 0.0
    %156 = vmatprep.subr.mxu0 0.0
    %157 = vmatpush1.msra.mxu0 0.0
    %158 = vmatprep.subr.mxu0 0.0
    %159 = vmatpush1.msra.mxu0 0.0
    %160 = vmatprep.subr.mxu0 0.0
    %161 = vmatpush1.msra.mxu0 0.0
    %162 = vmatprep.subr.mxu0 0.0
    %163 = vmatpush1.msra.mxu0 0.0
    %164 = vmatprep.subr.mxu0 0.0
    %165 = vmatpush1.msra.mxu0 0.0
    %166 = vmatprep.mubr.f32.mxu0 0.0
    %167 = vmatmul.mubr.f32.gmra.mrb[0].mxu0 %v54
    %v168 = vpop.f32.mrb[0].mxu0
    %v169 = vadd.f32 %v95, %v168
    %v170 = vpop.f32.mrb[0].mxu0
    %v171 = vadd.f32 %v99, %v170
    %172 = vmatprep.mubr.f32.mxu0 0.0
    %173 = vmatmul.mubr.f32.gmra.mrb[0].mxu0 %v55
    %v174 = vpop.f32.mrb[0].mxu0
    %v175 = vadd.f32 %v95, %v174
    %v176 = vpop.f32.mrb[0].mxu0
    %v177 = vadd.f32 %v99, %v176
    %178 = vmatprep.mubr.f32.mxu0 0.0
    %179 = vmatmul.mubr.f32.gmra.mrb[0].mxu0 %v56
    %v180 = vpop.f32.mrb[0].mxu0
    %v181 = vadd.f32 %v95, %v180
    %v182 = vpop.f32.mrb[0].mxu0
    %v183 = vadd.f32 %v99, %v182
    %184 = vmatprep.mubr.f32.mxu0 0.0
    %185 = vmatmul.mubr.f32.gmra.mrb[0].mxu0 %v57
    %v186 = vpop.f32.mrb[0].mxu0
    %v187 = vadd.f32 %v95, %v186
    %v188 = vpop.f32.mrb[0].mxu0
    %v189 = vadd.f32 %v99, %v188
    %190 = vdwg.mxu0
    %v191 = vmax.f32 %v169, 0.0
    %v192 = vmax.f32 %v171, 0.0
    %v193 = vmax.f32 %v175, 0.0
    %v194 = vmax.f32 %v177, 0.0
    %v195 = vmax.f32 %v181, 0.0
    %v196 = vmax.f32 %v183, 0.0
    %v197 = vmax.f32 %v187, 0.0
    %v198 = vmax.f32 %v189, 0.0
    %v199 = vld [vmem:[#allocation4] sm:$0xff]
    %v200 = vld [vmem:[#allocation4 + $0x8] sm:$0xff]
    %v201 = vld [vmem:[#allocation4 + $0x10] sm:$0xff]
    %v202 = vld [vmem:[#allocation4 + $0x18] sm:$0xff]
    %v203 = vld [vmem:[#allocation4 + $0x20] sm:$0xff]
    %v204 = vld [vmem:[#allocation4 + $0x28] sm:$0xff]
    %v205 = vld [vmem:[#allocation4 + $0x30] sm:$0xff]
    %v206 = vld [vmem:[#allocation4 + $0x38] sm:$0xff]
    %v207 = vld [vmem:[#allocation4 + $0x40] sm:$0xff]
    %v208 = vld [vmem:[#allocation4 + $0x48] sm:$0xff]
    %v209 = vld [vmem:[#allocation4 + $0x50] sm:$0xff]
    %v210 = vld [vmem:[#allocation4 + $0x58] sm:$0xff]
    %v211 = vld [vmem:[#allocation4 + $0x60] sm:$0xff]
    %v212 = vld [vmem:[#allocation4 + $0x68] sm:$0xff]
    %v213 = vld [vmem:[#allocation4 + $0x70] sm:$0xff]
    %v214 = vld [vmem:[#allocation4 + $0x78] sm:$0xff]
    %v215 = vld [vmem:[#allocation4 + $0x80] sm:$0xff]
    %v216 = vld [vmem:[#allocation4 + $0x88] sm:$0xff]
    %v217 = vld [vmem:[#allocation4 + $0x90] sm:$0xff]
    %v218 = vld [vmem:[#allocation4 + $0x98] sm:$0xff]
    %v219 = vld [vmem:[#allocation4 + $0xa0] sm:$0xff]
    %v220 = vld [vmem:[#allocation4 + $0xa8] sm:$0xff]
    %v221 = vld [vmem:[#allocation4 + $0xb0] sm:$0xff]
    %v222 = vld [vmem:[#allocation4 + $0xb8] sm:$0xff]
    %v223 = vld [vmem:[#allocation4 + $0xc0] sm:$0xff]
    %v224 = vld [vmem:[#allocation4 + $0xc8] sm:$0xff]
    %v225 = vld [vmem:[#allocation4 + $0xd0] sm:$0xff]
    %v226 = vld [vmem:[#allocation4 + $0xd8] sm:$0xff]
    %v227 = vld [vmem:[#allocation4 + $0xe0] sm:$0xff]
    %v228 = vld [vmem:[#allocation4 + $0xe8] sm:$0xff]
    %v229 = vld [vmem:[#allocation4 + $0xf0] sm:$0xff]
    %v230 = vld [vmem:[#allocation4 + $0xf8] sm:$0xff]
    %v231 = vld [vmem:[%s4] sm:$0x1]
    %v233 = vlaneseq
    %v234 = vshrl.u32 %v233, 7
    %v235 = vsub.s32 0, %v234
    %v236 = vrot.slane %v231, %v235
    %238 = vmatprep.subr.mxu0 0.0
    %239 = vmatpush1.msra.mxu0 %v199
    %240 = vmatprep.subr.mxu0 0.0
    %241 = vmatpush1.msra.mxu0 %v200
    %242 = vmatprep.subr.mxu0 0.0
    %243 = vmatpush1.msra.mxu0 %v201
    %244 = vmatprep.subr.mxu0 0.0
    %245 = vmatpush1.msra.mxu0 %v202
    %246 = vmatprep.subr.mxu0 0.0
    %247 = vmatpush1.msra.mxu0 %v203
    %248 = vmatprep.subr.mxu0 0.0
    %249 = vmatpush1.msra.mxu0 %v204
    %250 = vmatprep.subr.mxu0 0.0
    %251 = vmatpush1.msra.mxu0 %v205
    %252 = vmatprep.subr.mxu0 0.0
    %253 = vmatpush1.msra.mxu0 %v206
    %254 = vmatprep.subr.mxu0 0.0
    %255 = vmatpush1.msra.mxu0 %v207
    %256 = vmatprep.subr.mxu0 0.0
    %257 = vmatpush1.msra.mxu0 %v208
    %258 = vmatprep.subr.mxu0 0.0
    %259 = vmatpush1.msra.mxu0 %v209
    %260 = vmatprep.subr.mxu0 0.0
    %261 = vmatpush1.msra.mxu0 %v210
    %262 = vmatprep.subr.mxu0 0.0
    %263 = vmatpush1.msra.mxu0 %v211
    %264 = vmatprep.subr.mxu0 0.0
    %265 = vmatpush1.msra.mxu0 %v212
    %266 = vmatprep.subr.mxu0 0.0
    %267 = vmatpush1.msra.mxu0 %v213
    %268 = vmatprep.subr.mxu0 0.0
    %269 = vmatpush1.msra.mxu0 %v214
    %270 = vmatprep.subr.mxu0 0.0
    %271 = vmatpush1.msra.mxu0 %v215
    %272 = vmatprep.subr.mxu0 0.0
    %273 = vmatpush1.msra.mxu0 %v216
    %274 = vmatprep.subr.mxu0 0.0
    %275 = vmatpush1.msra.mxu0 %v217
    %276 = vmatprep.subr.mxu0 0.0
    %277 = vmatpush1.msra.mxu0 %v218
    %278 = vmatprep.subr.mxu0 0.0
    %279 = vmatpush1.msra.mxu0 %v219
    %280 = vmatprep.subr.mxu0 0.0
    %281 = vmatpush1.msra.mxu0 %v220
    %282 = vmatprep.subr.mxu0 0.0
    %283 = vmatpush1.msra.mxu0 %v221
    %284 = vmatprep.subr.mxu0 0.0
    %285 = vmatpush1.msra.mxu0 %v222
    %286 = vmatprep.subr.mxu0 0.0
    %287 = vmatpush1.msra.mxu0 %v223
    %288 = vmatprep.subr.mxu0 0.0
    %289 = vmatpush1.msra.mxu0 %v224
    %290 = vmatprep.subr.mxu0 0.0
    %291 = vmatpush1.msra.mxu0 %v225
    %292 = vmatprep.subr.mxu0 0.0
    %293 = vmatpush1.msra.mxu0 %v226
    %294 = vmatprep.subr.mxu0 0.0
    %295 = vmatpush1.msra.mxu0 %v227
    %296 = vmatprep.subr.mxu0 0.0
    %297 = vmatpush1.msra.mxu0 %v228
    %298 = vmatprep.subr.mxu0 0.0
    %299 = vmatpush1.msra.mxu0 %v229
    %300 = vmatprep.subr.mxu0 0.0
    %301 = vmatpush1.msra.mxu0 %v230
    %302 = vmatprep.mubr.f32.mxu0 %v192
    %303 = vmatmul.mubr.f32.gmra.mrb[0].mxu0 %v191
    %v304 = vpop.f32.mrb[0].mxu0
    %v305 = vadd.f32 %v236, %v304
    %v306 = vpop.f32.mrb[0].mxu0
    %307 = vmatprep.mubr.f32.mxu0 %v194
    %308 = vmatmul.mubr.f32.gmra.mrb[0].mxu0 %v193
    %v309 = vpop.f32.mrb[0].mxu0
    %v310 = vadd.f32 %v236, %v309
    %v311 = vpop.f32.mrb[0].mxu0
    %312 = vmatprep.mubr.f32.mxu0 %v196
    %313 = vmatmul.mubr.f32.gmra.mrb[0].mxu0 %v195
    %v314 = vpop.f32.mrb[0].mxu0
    %v315 = vadd.f32 %v236, %v314
    %v316 = vpop.f32.mrb[0].mxu0
    %317 = vmatprep.mubr.f32.mxu0 %v198
    %318 = vmatmul.mubr.f32.gmra.mrb[0].mxu0 %v197
    %v319 = vpop.f32.mrb[0].mxu0
    %v320 = vadd.f32 %v236, %v319
    %v321 = vpop.f32.mrb[0].mxu0
    %322 = vdwg.mxu0
    %v323 = vadd.f32 %v305, %v54
    %v324 = vadd.f32 %v310, %v55
    %v325 = vadd.f32 %v315, %v56
    %v326 = vadd.f32 %v320, %v57
    %327 = vadd.xlane.f32.xlu0 %v323
    %v328 = vpop.xlane.xlu0 %327
    %329 = vadd.xlane.f32.xlu0 %v324
    %v330 = vpop.xlane.xlu0 %329
    %331 = vadd.xlane.f32.xlu0 %v325
    %v332 = vpop.xlane.xlu0 %331
    %333 = vadd.xlane.f32.xlu0 %v326
    %v334 = vpop.xlane.xlu0 %333
    %v335 = vmul.f32 %v328, 0.0078125
    %v336 = vmul.f32 %v330, 0.0078125
    %v337 = vmul.f32 %v332, 0.0078125
    %v338 = vmul.f32 %v334, 0.0078125
    %v339 = vmul.f32 %v323, %v323
    %v340 = vmul.f32 %v324, %v324
    %v341 = vmul.f32 %v325, %v325
    %v342 = vmul.f32 %v326, %v326
    %343 = vadd.xlane.f32.xlu0 %v339
    %v344 = vpop.xlane.xlu0 %343
    %345 = vadd.xlane.f32.xlu0 %v340
    %v346 = vpop.xlane.xlu0 %345
    %347 = vadd.xlane.f32.xlu0 %v341
    %v348 = vpop.xlane.xlu0 %347
    %349 = vadd.xlane.f32.xlu0 %v342
    %v350 = vpop.xlane.xlu0 %349
    %v351 = vmul.f32 %v344, 0.0078125
    %v352 = vmul.f32 %v346, 0.0078125
    %v353 = vmul.f32 %v348, 0.0078125
    %v354 = vmul.f32 %v350, 0.0078125
    %v355 = vmul.f32 %v335, %v335
    %v356 = vmul.f32 %v336, %v336
    %v357 = vmul.f32 %v337, %v337
    %v358 = vmul.f32 %v338, %v338
    %v359 = vsub.f32 %v351, %v355
    %v360 = vsub.f32 %v352, %v356
    %v361 = vsub.f32 %v353, %v357
    %v362 = vsub.f32 %v354, %v358
    %v363 = vsub.f32 %v323, %v335
    %v364 = vsub.f32 %v324, %v336
    %v365 = vsub.f32 %v325, %v337
    %v366 = vsub.f32 %v326, %v338
    %v367 = vadd.f32 %v359, 1e-05
    %v368 = vadd.f32 %v360, 1e-05
    %v369 = vadd.f32 %v361, 1e-05
    %v370 = vadd.f32 %v362, 1e-05
    %v371 = vrsqrt.pop %v367
    %v372 = vrsqrt.pop %v368
    %v373 = vrsqrt.pop %v369
    %v374 = vrsqrt.pop %v370
    %v375 = vmul.f32 %v363, %v371
    %v376 = vmul.f32 %v364, %v372
    %v377 = vmul.f32 %v365, %v373
    %v378 = vmul.f32 %v366, %v374
    %v379 = vld [vmem:[%s5] sm:$0x1]
    %v381 = vlaneseq
    %v382 = vshrl.u32 %v381, 7
    %v383 = vsub.s32 0, %v382
    %v384 = vrot.slane %v379, %v383
    %v386 = vmul.f32 %v375, %v384
    %v387 = vmul.f32 %v376, %v384
    %v388 = vmul.f32 %v377, %v384
    %v389 = vmul.f32 %v378, %v384
    %v390 = vld [vmem:[%s6] sm:$0x1]
    %v392 = vlaneseq
    %v393 = vshrl.u32 %v392, 7
    %v394 = vsub.s32 0, %v393
    %v395 = vrot.slane %v390, %v394
    %v397 = vadd.f32 %v386, %v395
    %v398 = vadd.f32 %v387, %v395
    %v399 = vadd.f32 %v388, %v395
    %v400 = vadd.f32 %v389, %v395
    %401 = vst [vmem:[%s7] sm:$0xff] %v397
    %402 = vst [vmem:[%s7 + $0x8] sm:$0xff] %v398
    %403 = vst [vmem:[%s7 + $0x10] sm:$0xff] %v399
    %404 = vst [vmem:[%s7 + $0x18] sm:$0xff] %v400
    // Predicated region
    $region38: #{ffn_forward.1} parent=1 // pred_check
      _
    $region39: #{ffn_forward.1} parent=1 // pred_check_branch
      %406 = sbr.rel (0) target = $region41
    $region40: #{ffn_forward.1} parent=1 // pred_region
      _
    $region41: #{ffn_forward.1} parent=1 // pred_fallthru
      _
    // Predicated region
    $region42: #{ffn_forward.1} parent=1 // pred_check
      _
    $region43: #{ffn_forward.1} parent=1 // pred_check_branch
      %408 = sbr.rel (0) target = $region45
    $region44: #{ffn_forward.1} parent=1 // pred_region
      _
    $region45: #{ffn_forward.1} parent=1 // pred_fallthru
      _
    %409 = vsyncpa [#allocation3], 1
    %410 = vsyncpa [#allocation5], 1

</llo_original>
